<compile_context>
chip_gen: v5e
topology: v5e:2x2
jax: 0.10.0
libtpu: 0.0.40
codegen_flags: <defaults>
</compile_context>

<pallas_src>
import functools
import math

import jax
import jax.numpy as jnp
from jax.experimental import pallas as pl
from jax.experimental.pallas import tpu as pltpu

LN_EPS = 1e-5


def _mlm_head_kernel(x_ref, w1_ref, b1_ref, g_ref, beta_ref, w2_ref, b2_ref,
                     o_ref, h_ref):
    # Grid: (row tiles i, vocab tiles j).  Shapes seen by the kernel:
    #   x: (tm, H) bf16, w1: (H, NH) bf16, b1/gamma/beta: (1, NH) f32,
    #   w2: (NH, tn) bf16, b2: (1, tn) f32, o: (tm, tn) out_dtype,
    #   h_ref: (tm, NH) bf16 VMEM scratch (persists across the vocab axis).

    # Linear1 + ReLU + LayerNorm: compute once per row tile, cache in scratch.
    @pl.when(pl.program_id(1) == 0)
    def _():
        h = jnp.dot(x_ref[...], w1_ref[...],
                    preferred_element_type=jnp.float32)           # MXU, f32 acc
        h = jnp.maximum(h + b1_ref[...], 0.0)                     # bias + ReLU
        mean = jnp.mean(h, axis=-1, keepdims=True)                # LN stats f32
        centered = h - mean
        var = jnp.mean(centered * centered, axis=-1, keepdims=True)
        h = centered * jax.lax.rsqrt(var + LN_EPS)
        h = h * g_ref[...] + beta_ref[...]
        h_ref[...] = h.astype(h_ref.dtype)

    # Linear2 over this vocab tile (always runs, reuses the cached h).
    out = jnp.dot(h_ref[...], w2_ref[...],
                  preferred_element_type=jnp.float32)
    o_ref[...] = (out + b2_ref[...]).astype(o_ref.dtype)


def _round_up(x, m):
    return ((x + m - 1) // m) * m


@functools.lru_cache(maxsize=1)
def _chip_tiling():
    """Pick (tm, tn, vmem_limit_bytes, min_row_tiles) per TPU generation."""
    try:
        kind = jax.devices()[0].device_kind.lower()
    except Exception:  # pragma: no cover - no device visible
        kind = ""
    is_v5e = ("v5" in kind) and (("lite" in kind) or ("5e" in kind))
    is_v6 = "v6" in kind
    is_v7 = ("v7" in kind) or ("7x" in kind)
    if is_v5e or is_v6:
        # 128 MiB VMEM: tm=2048 halves w2 re-streaming vs 1024.
        # f32 out tile 16 MiB x2 + w2 + x + h + w1 stays ~50 MiB < 80 MiB limit.
        return dict(tm=2048, tn=2048, vmem_limit=80 * 1024 * 1024,
                    min_row_tiles=1)
    if is_v7:
        # 64 MiB physical VMEM: smaller tiles + scratch headroom, and keep at
        # least 2 row tiles so both TensorCores get work on the parallel axis.
        return dict(tm=1024, tn=1024, vmem_limit=40 * 1024 * 1024,
                    min_row_tiles=2)
    # Unknown / older chip: conservative settings.
    return dict(tm=1024, tn=1024, vmem_limit=40 * 1024 * 1024,
                min_row_tiles=1)


@functools.partial(
    jax.jit,
    static_argnames=("tm", "tn", "compute_dtype", "out_dtype",
                     "vmem_limit", "min_row_tiles"))
def mlm_head_pallas(masked_x_flat, w1, b1, gamma, beta, w2, b2,
                    *, tm=1024, tn=2048, compute_dtype=jnp.bfloat16,
                    out_dtype=jnp.float32, vmem_limit=48 * 1024 * 1024,
                    min_row_tiles=1):
    """masked_x_flat: (R, H) float32.  Returns (R, V) out_dtype logits."""
    R, H = masked_x_flat.shape
    NH = w1.shape[1]
    V = w2.shape[1]

    # Clamp tiles to the (possibly tiny) problem with TPU-friendly alignment:
    # row tile multiple of 16 (bf16 packs 16 sublanes/vreg), vocab tile a
    # multiple of 128 (lanes).
    tm = min(tm, _round_up(R, 16))
    if min_row_tiles > 1:
        # Ensure >= min_row_tiles row tiles (v7x megacore) when R allows.
        tm = min(tm, _round_up(max(1, math.ceil(R / min_row_tiles)), 16))
    tm = max(tm, 16)
    tn = min(tn, _round_up(V, 128))

    R_pad = _round_up(R, tm)
    V_pad = _round_up(V, tn)

    # bf16 streaming inputs (f32 accumulation happens inside the kernel).
    x = masked_x_flat.astype(compute_dtype)
    if R_pad != R:
        x = jnp.pad(x, ((0, R_pad - R), (0, 0)))

    w1c = w1.astype(compute_dtype)
    w2c = w2.astype(compute_dtype)
    b2c = b2
    if V_pad != V:
        w2c = jnp.pad(w2c, ((0, 0), (0, V_pad - V)))
        b2c = jnp.pad(b2c, ((0, 0), (0, V_pad - V)))

    grid = (R_pad // tm, V_pad // tn)

    # Advisory cost estimate so XLA can overlap the surrounding gather/cast.
    itemsize = jnp.dtype(compute_dtype).itemsize
    flops = 2 * R_pad * (H * NH + NH * V_pad)
    bytes_accessed = (
        R_pad * H * itemsize                               # x
        + H * NH * itemsize                                # w1
        + grid[0] * (NH * V_pad * itemsize)                # w2 re-stream / row tile
        + R_pad * V_pad * jnp.dtype(out_dtype).itemsize)   # output writeback
    cost = pl.CostEstimate(flops=flops, transcendentals=R_pad,
                           bytes_accessed=bytes_accessed)

    out = pl.pallas_call(
        _mlm_head_kernel,
        out_shape=jax.ShapeDtypeStruct((R_pad, V_pad), out_dtype),
        grid_spec=pltpu.PrefetchScalarGridSpec(
            num_scalar_prefetch=0,
            grid=grid,
            in_specs=[
                pl.BlockSpec((tm, H), lambda i, j: (i, 0)),    # x row tile
                pl.BlockSpec((H, NH), lambda i, j: (0, 0)),    # w1 (full)
                pl.BlockSpec((1, NH), lambda i, j: (0, 0)),    # b1
                pl.BlockSpec((1, NH), lambda i, j: (0, 0)),    # gamma
                pl.BlockSpec((1, NH), lambda i, j: (0, 0)),    # beta
                pl.BlockSpec((NH, tn), lambda i, j: (0, j)),   # w2 vocab tile
                pl.BlockSpec((1, tn), lambda i, j: (0, j)),    # b2 vocab tile
            ],
            out_specs=pl.BlockSpec((tm, tn), lambda i, j: (i, j)),
            scratch_shapes=[pltpu.VMEM((tm, NH), compute_dtype)],
        ),
        compiler_params=pltpu.CompilerParams(
            # Rows parallel (megacore sharding on v7x); vocab carries the
            # h-scratch so it must be "arbitrary" (and innermost).
            dimension_semantics=("parallel", "arbitrary"),
            vmem_limit_bytes=vmem_limit,
        ),
        cost_estimate=cost,
    )(x, w1c, b1, gamma, beta, w2c, b2c)

    return out[:R, :V]


def mask_language_modeling_forward(X, masked_positions, params,
                                   out_dtype=jnp.float32):
    """Mirrors MaskLanguageModeling.forward.

    X: (B, S, H) float32
    masked_positions: (B, P) int32
    returns: (B, P, vocab_size) logits in out_dtype (f32 default; set bf16 to
             halve output HBM writeback if the downstream loss tolerates it).
    """
    B = X.shape[0]
    P = masked_positions.shape[1]

    # Gather masked token representations (glue, plain JAX).
    pred_positions = masked_positions.reshape(-1)
    batch_idx = jnp.repeat(jnp.arange(B), P)
    masked_X = X[batch_idx, pred_positions]          # (B*P, H)

    cfg = _chip_tiling()
    out_flat = mlm_head_pallas(
        masked_X,
        params["w1"], params["b1"],
        params["gamma"], params["beta"],
        params["w2"], params["b2"],
        tm=cfg["tm"], tn=cfg["tn"],
        vmem_limit=cfg["vmem_limit"],
        min_row_tiles=cfg["min_row_tiles"],
        out_dtype=out_dtype,
    )
    return out_flat.reshape(B, P, -1)


def init_params(key, in_hidden, num_hiddens, vocab_size):
    k1, k2, k3, k4 = jax.random.split(key, 4)
    # Deterministic, Kaiming-uniform-ish init (synthetic; not a checkpoint).
    lim1 = 1.0 / jnp.sqrt(in_hidden)
    lim2 = 1.0 / jnp.sqrt(num_hiddens)
    return {
        "w1": jax.random.uniform(k1, (in_hidden, num_hiddens), jnp.float32,
                                 -lim1, lim1),
        "b1": jax.random.uniform(k2, (1, num_hiddens), jnp.float32,
                                 -lim1, lim1),
        "gamma": jnp.ones((1, num_hiddens), jnp.float32),
        "beta": jnp.zeros((1, num_hiddens), jnp.float32),
        "w2": jax.random.uniform(k3, (num_hiddens, vocab_size), jnp.float32,
                                 -lim2, lim2),
        "b2": jax.random.uniform(k4, (1, vocab_size), jnp.float32,
                                 -lim2, lim2),
    }


def _reference_forward(X, masked_positions, params):
    """Pure-JAX f32 reference of the PyTorch module for a sanity check."""
    B = X.shape[0]
    P = masked_positions.shape[1]
    batch_idx = jnp.repeat(jnp.arange(B), P)
    mx = X[batch_idx, masked_positions.reshape(-1)]
    h = mx @ params["w1"] + params["b1"]
    h = jnp.maximum(h, 0.0)
    mean = h.mean(-1, keepdims=True)
    var = ((h - mean) ** 2).mean(-1, keepdims=True)
    h = (h - mean) / jnp.sqrt(var + LN_EPS)
    h = h * params["gamma"] + params["beta"]
    out = h @ params["w2"] + params["b2"]
    return out.reshape(B, P, -1)


if __name__ == "__main__":
    key = jax.random.PRNGKey(0)
    kx, kp, kw = jax.random.split(key, 3)

    batch, seq_len, hidden = 2, 16, 32
    num_hiddens, vocab_size = 32, 128
    num_pred = 4

    X = jax.random.normal(kx, (batch, seq_len, hidden), jnp.float32)
    masked_positions = jax.random.randint(kp, (batch, num_pred), 0, seq_len,
                                          dtype=jnp.int32)
    params = init_params(kw, hidden, num_hiddens, vocab_size)

    y = mask_language_modeling_forward(X, masked_positions, params)
    y = jax.block_until_ready(y)

    y_ref = _reference_forward(X, masked_positions, params)
    assert y.shape == (batch, num_pred, vocab_size)
    # bf16-streamed weights/activations with f32 accumulation -> loose tol
    # against the pure-f32 reference.
    assert jnp.allclose(y, y_ref, atol=5e-2, rtol=5e-2), float(
        jnp.max(jnp.abs(y - y_ref)))

    print("KERNEL_OK")
</pallas_src>

<mosaic_0001>
module attributes {stable_mosaic.version = 11 : i64} {
  func.func @_mlm_head_kernel(%arg0: i32, %arg1: i32, %arg2: memref<16x32xbf16, #tpu.memory_space<vmem>>, %arg3: memref<32x32xbf16, #tpu.memory_space<vmem>>, %arg4: memref<1x32xf32, #tpu.memory_space<vmem>>, %arg5: memref<1x32xf32, #tpu.memory_space<vmem>>, %arg6: memref<1x32xf32, #tpu.memory_space<vmem>>, %arg7: memref<32x128xbf16, #tpu.memory_space<vmem>>, %arg8: memref<1x128xf32, #tpu.memory_space<vmem>>, %arg9: memref<16x128xf32, #tpu.memory_space<vmem>>, %arg10: memref<16x32xbf16, #tpu.memory_space<vmem>>) attributes {dimension_semantics = [#tpu.dimension_semantics<parallel>, #tpu.dimension_semantics<arbitrary>], iteration_bounds = array<i64: 1, 1>, scalar_prefetch = 0 : i64, scratch_operands = 1 : i64, tpu.core_type = #tpu.core_type<tc>, window_params = [{transform_indices = @transform_0, window_bounds = array<i64: 16, 32>}, {pipeline_mode = #tpu.pipeline_mode<synchronous>, transform_indices = @transform_1, window_bounds = array<i64: 32, 32>}, {pipeline_mode = #tpu.pipeline_mode<synchronous>, transform_indices = @transform_2, window_bounds = array<i64: 1, 32>}, {pipeline_mode = #tpu.pipeline_mode<synchronous>, transform_indices = @transform_3, window_bounds = array<i64: 1, 32>}, {pipeline_mode = #tpu.pipeline_mode<synchronous>, transform_indices = @transform_4, window_bounds = array<i64: 1, 32>}, {transform_indices = @transform_5, window_bounds = array<i64: 32, 128>}, {transform_indices = @transform_6, window_bounds = array<i64: 1, 128>}, {transform_indices = @transform_7, window_bounds = array<i64: 16, 128>}]} {
    %c0_i32 = arith.constant 0 : i32
    %0 = arith.cmpi eq, %arg1, %c0_i32 : i32
    %1 = arith.extui %0 : i1 to i32
    %c0_i32_0 = arith.constant 0 : i32
    %2 = arith.cmpi ne, %1, %c0_i32_0 : i32
    scf.if %2 {
      %c0_8 = arith.constant 0 : index
      %c0_9 = arith.constant 0 : index
      %10 = vector.load %arg2[%c0_8, %c0_9] : memref<16x32xbf16, #tpu.memory_space<vmem>>, vector<16x32xbf16>
      %c0_10 = arith.constant 0 : index
      %c0_11 = arith.constant 0 : index
      %11 = vector.load %arg3[%c0_10, %c0_11] : memref<32x32xbf16, #tpu.memory_space<vmem>>, vector<32x32xbf16>
      %cst_12 = arith.constant dense<0.000000e+00> : vector<16x32xf32>
      %12 = tpu.matmul %10, %11, %cst_12 {dimension_numbers = #tpu.dot_dimension_numbers<[1], [0], [0], [1], [0, 0, 1, 1], [], []>} : vector<16x32xbf16>, vector<32x32xbf16>, vector<16x32xf32> -> vector<16x32xf32>
      %c0_13 = arith.constant 0 : index
      %c0_14 = arith.constant 0 : index
      %13 = vector.load %arg4[%c0_13, %c0_14] : memref<1x32xf32, #tpu.memory_space<vmem>>, vector<1x32xf32>
      %14 = vector.broadcast %13 : vector<1x32xf32> to vector<16x32xf32>
      %15 = arith.addf %12, %14 : vector<16x32xf32>
      %cst_15 = arith.constant 0.000000e+00 : f32
      %16 = vector.broadcast %cst_15 : f32 to vector<16x32xf32>
      %17 = arith.maximumf %15, %16 : vector<16x32xf32>
      %cst_16 = arith.constant dense<0.000000e+00> : vector<16xf32>
      %18 = vector.multi_reduction <add>, %17, %cst_16 [1] : vector<16x32xf32> to vector<16xf32>
      %19 = vector.shape_cast %18 : vector<16xf32> to vector<16x1xf32>
      %cst_17 = arith.constant 3.200000e+01 : f32
      %20 = vector.broadcast %cst_17 : f32 to vector<16x1xf32>
      %21 = arith.divf %19, %20 : vector<16x1xf32>
      %22 = vector.broadcast %21 : vector<16x1xf32> to vector<16x32xf32>
      %23 = arith.subf %17, %22 : vector<16x32xf32>
      %24 = arith.mulf %23, %23 : vector<16x32xf32>
      %cst_18 = arith.constant dense<0.000000e+00> : vector<16xf32>
      %25 = vector.multi_reduction <add>, %24, %cst_18 [1] : vector<16x32xf32> to vector<16xf32>
      %26 = vector.shape_cast %25 : vector<16xf32> to vector<16x1xf32>
      %cst_19 = arith.constant 3.200000e+01 : f32
      %27 = vector.broadcast %cst_19 : f32 to vector<16x1xf32>
      %28 = arith.divf %26, %27 : vector<16x1xf32>
      %cst_20 = arith.constant 9.99999974E-6 : f32
      %29 = vector.broadcast %cst_20 : f32 to vector<16x1xf32>
      %30 = arith.addf %28, %29 : vector<16x1xf32>
      %31 = math.rsqrt %30 : vector<16x1xf32>
      %32 = vector.broadcast %31 : vector<16x1xf32> to vector<16x32xf32>
      %33 = arith.mulf %23, %32 : vector<16x32xf32>
      %c0_21 = arith.constant 0 : index
      %c0_22 = arith.constant 0 : index
      %34 = vector.load %arg5[%c0_21, %c0_22] : memref<1x32xf32, #tpu.memory_space<vmem>>, vector<1x32xf32>
      %35 = vector.broadcast %34 : vector<1x32xf32> to vector<16x32xf32>
      %36 = arith.mulf %33, %35 : vector<16x32xf32>
      %c0_23 = arith.constant 0 : index
      %c0_24 = arith.constant 0 : index
      %37 = vector.load %arg6[%c0_23, %c0_24] : memref<1x32xf32, #tpu.memory_space<vmem>>, vector<1x32xf32>
      %38 = vector.broadcast %37 : vector<1x32xf32> to vector<16x32xf32>
      %39 = arith.addf %36, %38 : vector<16x32xf32>
      %40 = arith.truncf %39 : vector<16x32xf32> to vector<16x32xbf16>
      %c0_25 = arith.constant 0 : index
      %c0_26 = arith.constant 0 : index
      %41 = vector.load %arg10[%c0_25, %c0_26] : memref<16x32xbf16, #tpu.memory_space<vmem>>, vector<16x32xbf16>
      tpu.vector_store %arg10[%c0_25, %c0_26], %40 {strides = array<i32>} : memref<16x32xbf16, #tpu.memory_space<vmem>>, vector<16x32xbf16>,
    } else {
    }
    %c0 = arith.constant 0 : index
    %c0_1 = arith.constant 0 : index
    %3 = vector.load %arg10[%c0, %c0_1] : memref<16x32xbf16, #tpu.memory_space<vmem>>, vector<16x32xbf16>
    %c0_2 = arith.constant 0 : index
    %c0_3 = arith.constant 0 : index
    %4 = vector.load %arg7[%c0_2, %c0_3] : memref<32x128xbf16, #tpu.memory_space<vmem>>, vector<32x128xbf16>
    %cst = arith.constant dense<0.000000e+00> : vector<16x128xf32>
    %5 = tpu.matmul %3, %4, %cst {dimension_numbers = #tpu.dot_dimension_numbers<[1], [0], [0], [1], [0, 0, 1, 1], [], []>} : vector<16x32xbf16>, vector<32x128xbf16>, vector<16x128xf32> -> vector<16x128xf32>
    %c0_4 = arith.constant 0 : index
    %c0_5 = arith.constant 0 : index
    %6 = vector.load %arg8[%c0_4, %c0_5] : memref<1x128xf32, #tpu.memory_space<vmem>>, vector<1x128xf32>
    %7 = vector.broadcast %6 : vector<1x128xf32> to vector<16x128xf32>
    %8 = arith.addf %5, %7 : vector<16x128xf32>
    %c0_6 = arith.constant 0 : index
    %c0_7 = arith.constant 0 : index
    %9 = vector.load %arg9[%c0_6, %c0_7] : memref<16x128xf32, #tpu.memory_space<vmem>>, vector<16x128xf32>
    tpu.vector_store %arg9[%c0_6, %c0_7], %8 {strides = array<i32>} : memref<16x128xf32, #tpu.memory_space<vmem>>, vector<16x128xf32>,
    return
  }
  func.func @transform_0(%arg0: i32, %arg1: i32) -> (i32, i32) {
    %c0_i32 = arith.constant 0 : i32
    %c0_i32_0 = arith.constant 0 : i32
    return %arg0, %c0_i32 : i32, i32
  }
  func.func @transform_1(%arg0: i32, %arg1: i32) -> (i32, i32) {
    %c0_i32 = arith.constant 0 : i32
    %c0_i32_0 = arith.constant 0 : i32
    %c0_i32_1 = arith.constant 0 : i32
    return %c0_i32, %c0_i32_0 : i32, i32
  }
  func.func @transform_2(%arg0: i32, %arg1: i32) -> (i32, i32) {
    %c0_i32 = arith.constant 0 : i32
    %c0_i32_0 = arith.constant 0 : i32
    %c0_i32_1 = arith.constant 0 : i32
    return %c0_i32, %c0_i32_0 : i32, i32
  }
  func.func @transform_3(%arg0: i32, %arg1: i32) -> (i32, i32) {
    %c0_i32 = arith.constant 0 : i32
    %c0_i32_0 = arith.constant 0 : i32
    %c0_i32_1 = arith.constant 0 : i32
    return %c0_i32, %c0_i32_0 : i32, i32
  }
  func.func @transform_4(%arg0: i32, %arg1: i32) -> (i32, i32) {
    %c0_i32 = arith.constant 0 : i32
    %c0_i32_0 = arith.constant 0 : i32
    %c0_i32_1 = arith.constant 0 : i32
    return %c0_i32, %c0_i32_0 : i32, i32
  }
  func.func @transform_5(%arg0: i32, %arg1: i32) -> (i32, i32) {
    %c0_i32 = arith.constant 0 : i32
    %c0_i32_0 = arith.constant 0 : i32
    return %c0_i32, %arg1 : i32, i32
  }
  func.func @transform_6(%arg0: i32, %arg1: i32) -> (i32, i32) {
    %c0_i32 = arith.constant 0 : i32
    %c0_i32_0 = arith.constant 0 : i32
    return %c0_i32, %arg1 : i32, i32
  }
  func.func @transform_7(%arg0: i32, %arg1: i32) -> (i32, i32) {
    %c0_i32 = arith.constant 0 : i32
    return %arg0, %arg1 : i32, i32
  }
}

</mosaic_0001>

<llo_original>
// kernel: mlm_head_pallas.1
$region0: #{mlm_head_pallas.1}
  #allocation0 [shape = 'u32[]', space=smem, size = 0x4, offset = 0x4, fixed_abs, tag = 'smem constant byte address 0x4 - core index']
  #allocation1 [shape = 'u32[72,128]{1,0:T(1,128)}', space=vmem, size = 0x9000, scoped, tag = 'internal scratch']
  #allocation2 [shape = 'bf16[16,32]{1,0:T(8,128)(2,1)}', space=vmem, size = 0x1000, scoped, tag = 'scratch operand']
  %s0 = inlined_call_operand.vmem [shape: bf16[16,32], index: 0, kind: input, shape index: {}]
  %s1 = inlined_call_operand.vmem [shape: bf16[32,32], index: 1, kind: input, shape index: {}]
  %s2 = inlined_call_operand.vmem [shape: f32[1,32], index: 2, kind: input, shape index: {}]
  %s3 = inlined_call_operand.vmem [shape: f32[1,32], index: 3, kind: input, shape index: {}]
  %s4 = inlined_call_operand.vmem [shape: f32[1,32], index: 4, kind: input, shape index: {}]
  %s5 = inlined_call_operand.vmem [shape: bf16[32,128], index: 5, kind: input, shape index: {}]
  %s6 = inlined_call_operand.vmem [shape: f32[1,128], index: 6, kind: input, shape index: {}]
  %s7 = inlined_call_operand.vmem [shape: f32[16,128], index: 7, kind: output, shape index: {}]
  %s8 = sld [smem:[#allocation0]]
  $region42: #{mlm_head_pallas.1} parent=0
    _
  %s10 = ssub.s32 1, %s8
  %s11 = scalar_select 0, %s10, %s8
  // Predicated region
  $region2: #{mlm_head_pallas.1} parent=0 // pred_check
    _
  $region3: #{mlm_head_pallas.1} parent=0 // pred_check_branch
    %13 = sbr.rel (0) target = $region5
  $region4: #{mlm_head_pallas.1} parent=0 // pred_region
    _
  $region5: #{mlm_head_pallas.1} parent=0 // pred_fallthru
    _
  // Predicated region
  $region6: #{mlm_head_pallas.1} parent=0 // pred_check
    _
  $region7: #{mlm_head_pallas.1} parent=0 // pred_check_branch
    %15 = sbr.rel (0) target = $region9
  $region8: #{mlm_head_pallas.1} parent=0 // pred_region
    _
  $region9: #{mlm_head_pallas.1} parent=0 // pred_fallthru
    _
  // Predicated region
  $region10: #{mlm_head_pallas.1} parent=0 // pred_check
    _
  $region11: #{mlm_head_pallas.1} parent=0 // pred_check_branch
    %17 = sbr.rel (0) target = $region13
  $region12: #{mlm_head_pallas.1} parent=0 // pred_region
    _
  $region13: #{mlm_head_pallas.1} parent=0 // pred_fallthru
    _
  // Predicated region
  $region14: #{mlm_head_pallas.1} parent=0 // pred_check
    _
  $region15: #{mlm_head_pallas.1} parent=0 // pred_check_branch
    %19 = sbr.rel (0) target = $region17
  $region16: #{mlm_head_pallas.1} parent=0 // pred_region
    _
  $region17: #{mlm_head_pallas.1} parent=0 // pred_fallthru
    _
  // Predicated region
  $region18: #{mlm_head_pallas.1} parent=0 // pred_check
    _
  $region19: #{mlm_head_pallas.1} parent=0 // pred_check_branch
    %21 = sbr.rel (0) target = $region21
  $region20: #{mlm_head_pallas.1} parent=0 // pred_region
    _
  $region21: #{mlm_head_pallas.1} parent=0 // pred_fallthru
    _
  // Predicated region
  $region22: #{mlm_head_pallas.1} parent=0 // pred_check
    _
  $region23: #{mlm_head_pallas.1} parent=0 // pred_check_branch
    %23 = sbr.rel (0) target = $region25
  $region24: #{mlm_head_pallas.1} parent=0 // pred_region
    _
  $region25: #{mlm_head_pallas.1} parent=0 // pred_fallthru
    _
  // Predicated region
  $region26: #{mlm_head_pallas.1} parent=0 // pred_check
    _
  $region27: #{mlm_head_pallas.1} parent=0 // pred_check_branch
    %25 = sbr.rel (0) target = $region29
  $region28: #{mlm_head_pallas.1} parent=0 // pred_region
    _
  $region29: #{mlm_head_pallas.1} parent=0 // pred_fallthru
    _
  %p27 = scmp.eq.s32.totalorder 0, 0
  // Predicated region
  $region30: #{mlm_head_pallas.1} parent=0 // pred_check
    %p28 = pneg %p27
  $region31: #{mlm_head_pallas.1} parent=0 // pred_check_branch
    %30 = sbr.rel (%p28) target = $region33
  $region32: #{mlm_head_pallas.1} parent=0 // pred_region
    %v31 = vld [vmem:[%s0] sm:$0xf]
    %v32 = vld [vmem:[%s0 + $0x4] sm:$0xf]
    %v33 = vld [vmem:[%s1] sm:$0xf]
    %v34 = vld [vmem:[%s1 + $0x4] sm:$0xf]
    %v35 = vld [vmem:[%s1 + $0x8] sm:$0xf]
    %v36 = vld [vmem:[%s1 + $0xc] sm:$0xf]
    %v37 = vld [vmem:[%s2] sm:$0x1]
    %v39 = vperm.slane %v37, 0
    %v43 = vunpack.c.l.b16 %v31
    %v44 = vunpack.c.l.b16 %v32
    %v45 = vpack.c.b16 %v44, %v43
    %v50 = vunpack.c.l.b16 %v33
    %v51 = vunpack.c.l.b16 %v34
    %v52 = vunpack.c.l.b16 %v35
    %v53 = vunpack.c.l.b16 %v36
    %v54 = vpack.c.b16 %v51, %v50
    %v55 = vpack.c.b16 %v53, %v52
    %vm58 = vcmask 261120
    %v60 = vsel %vm58, %v45, 0
    %62 = vmatpush.bf16.msra.mxu0 0
    %63 = vmatpush.bf16.msra.mxu0 0
    %64 = vmatpush.bf16.msra.mxu0 0
    %65 = vmatpush.bf16.msra.mxu0 0
    %66 = vmatpush.bf16.msra.mxu0 0
    %67 = vmatpush.bf16.msra.mxu0 0
    %68 = vmatpush.bf16.msra.mxu0 %v55
    %69 = vmatpush.bf16.msra.mxu0 %v54
    %70 = vmatmul.bf16.gmra.mxu0 %v60
    %v71 = vpop.f32.mrf.mxu0
    %v72 = vadd.f32 %v39, %v71
    %v73 = vpop.f32.mrf.mxu0
    %v74 = vadd.f32 %v39, %v73
    %75 = vdwg.mxu0
    %v76 = vmax.f32 %v72, 0.0
    %v77 = vmax.f32 %v74, 0.0
    %v78 = vsel %vm58, %v76, 0.0
    %79 = vadd.xlane.f32.xlu0 %v78
    %v80 = vpop.xlane.xlu0 %79
    %v81 = vsel %vm58, %v77, 0.0
    %82 = vadd.xlane.f32.xlu0 %v81
    %v83 = vpop.xlane.xlu0 %82
    %v84 = vrcp.pop 32.0
    %v85 = vmul.f32 32.0, %v84
    %v86 = vsub.f32 1.0, %v85
    %v87 = vmul.f32 %v84, %v86
    %v88 = vadd.f32 %v84, %v87
    %vm89 = vweird.f32 %v84
    %v90 = vsel %vm89, %v84, %v88
    %v91 = vmul.f32 %v80, %v90
    %v92 = vmul.f32 %v83, %v90
    %v93 = vsub.f32 %v76, %v91
    %v94 = vsub.f32 %v77, %v92
    %v95 = vmul.f32 %v93, %v93
    %v96 = vmul.f32 %v94, %v94
    %v97 = vsel %vm58, %v95, 0.0
    %98 = vadd.xlane.f32.xlu0 %v97
    %v99 = vpop.xlane.xlu0 %98
    %v100 = vsel %vm58, %v96, 0.0
    %101 = vadd.xlane.f32.xlu0 %v100
    %v102 = vpop.xlane.xlu0 %101
    %v103 = vmul.f32 %v99, %v90
    %v104 = vmul.f32 %v102, %v90
    %v105 = vadd.f32 %v103, 1e-05
    %v106 = vadd.f32 %v104, 1e-05
    %v107 = vrsqrt.pop %v105
    %v108 = vmul.f32 %v107, %v105
    %v109 = vmul.f32 %v108, %v107
    %v110 = vmul.f32 0.5, %v109
    %v111 = vsub.f32 1.5, %v110
    %v112 = vmul.f32 %v107, %v111
    %vm113 = vweird.f32 %v105
    %vm114 = vweird.f32 %v107
    %vm115 = vmor %vm113, %vm114
    %v116 = vsel %vm115, %v107, %v112
    %v117 = vrsqrt.pop %v106
    %v118 = vmul.f32 %v117, %v106
    %v119 = vmul.f32 %v118, %v117
    %v120 = vmul.f32 0.5, %v119
    %v121 = vsub.f32 1.5, %v120
    %v122 = vmul.f32 %v117, %v121
    %vm123 = vweird.f32 %v106
    %vm124 = vweird.f32 %v117
    %vm125 = vmor %vm123, %vm124
    %v126 = vsel %vm125, %v117, %v122
    %v127 = vmul.f32 %v93, %v116
    %v128 = vmul.f32 %v94, %v126
    %v129 = vld [vmem:[%s3] sm:$0x1]
    %v131 = vperm.slane %v129, 0
    %v133 = vmul.f32 %v127, %v131
    %v134 = vmul.f32 %v128, %v131
    %v135 = vld [vmem:[%s4] sm:$0x1]
    %v137 = vperm.slane %v135, 0
    %v139 = vadd.f32 %v133, %v137
    %v140 = vadd.f32 %v134, %v137
    %v141 = vpack.c.bf16 %v139, %v139
    %v142 = vpack.c.bf16 %v140, %v140
    %vm143 = vcmask 257024
    %144 = vst.msk [vmem:[#allocation2] sm:$0xf] %vm143, %v141
    %145 = vst.msk [vmem:[#allocation2 + $0x4] sm:$0xf] %vm143, %v142
  $region33: #{mlm_head_pallas.1} parent=0 // pred_fallthru
    _
  %v146 = vld [vmem:[#allocation2] sm:$0xf]
  %v147 = vld [vmem:[#allocation2 + $0x4] sm:$0xf]
  %v148 = vld [vmem:[%s5] sm:$0xf]
  %v149 = vld [vmem:[%s5 + $0x4] sm:$0xf]
  %v150 = vld [vmem:[%s5 + $0x8] sm:$0xf]
  %v151 = vld [vmem:[%s5 + $0xc] sm:$0xf]
  %v152 = vld [vmem:[%s6] sm:$0x1]
  %v154 = vperm.slane %v152, 0
  %v158 = vunpack.c.l.b16 %v146
  %v159 = vunpack.c.l.b16 %v147
  %v160 = vpack.c.b16 %v159, %v158
  %v165 = vunpack.c.l.b16 %v148
  %v166 = vunpack.c.l.b16 %v149
  %v167 = vunpack.c.l.b16 %v150
  %v168 = vunpack.c.l.b16 %v151
  %v169 = vpack.c.b16 %v166, %v165
  %v170 = vpack.c.b16 %v168, %v167
  %vm173 = vcmask 261120
  %v175 = vsel %vm173, %v160, 0
  %177 = vmatpush.bf16.msra.mxu0 0
  %178 = vmatpush.bf16.msra.mxu0 0
  %179 = vmatpush.bf16.msra.mxu0 0
  %180 = vmatpush.bf16.msra.mxu0 0
  %181 = vmatpush.bf16.msra.mxu0 0
  %182 = vmatpush.bf16.msra.mxu0 0
  %183 = vmatpush.bf16.msra.mxu0 %v170
  %184 = vmatpush.bf16.msra.mxu0 %v169
  %185 = vmatmul.bf16.gmra.mxu0 %v175
  %v186 = vpop.f32.mrf.mxu0
  %v187 = vadd.f32 %v154, %v186
  %v188 = vpop.f32.mrf.mxu0
  %v189 = vadd.f32 %v154, %v188
  %190 = vdwg.mxu0
  %191 = vst [vmem:[%s7] sm:$0xff] %v187
  %192 = vst [vmem:[%s7 + $0x8] sm:$0xff] %v189
  // Predicated region
  $region34: #{mlm_head_pallas.1} parent=0 // pred_check
    _
  $region35: #{mlm_head_pallas.1} parent=0 // pred_check_branch
    %194 = sbr.rel (0) target = $region37
  $region36: #{mlm_head_pallas.1} parent=0 // pred_region
    _
  $region37: #{mlm_head_pallas.1} parent=0 // pred_fallthru
    _
  // Predicated region
  $region38: #{mlm_head_pallas.1} parent=0 // pred_check
    _
  $region39: #{mlm_head_pallas.1} parent=0 // pred_check_branch
    %196 = sbr.rel (0) target = $region41
  $region40: #{mlm_head_pallas.1} parent=0 // pred_region
    _
  $region41: #{mlm_head_pallas.1} parent=0 // pred_fallthru
    _

</llo_original>
